<compile_context>
chip_gen: v7x
topology: tpu7x:2x2x1
jax: 0.10.0
libtpu: 0.0.40
codegen_flags: <defaults>
</compile_context>

<pallas_src>
import functools

import jax
import jax.numpy as jnp
from jax.experimental import pallas as pl
from jax.experimental.pallas import tpu as pltpu

_LANES = 128


def _round_down(x, m):
    return (x // m) * m


def _tpu_tuning():
    """Per-generation tuning: (ncores, max_block_rows, vmem_limit_bytes).

    v7x: 2 TensorCores/chip but only 64 MiB VMEM -> 2-way core split, 4096-row
         blocks, 32 MiB scoped VMEM.
    v5e/v6e (single TC, 128 MiB VMEM): no core split, 8192-row blocks, 64 MiB.
    """
    try:
        kind = jax.devices()[0].device_kind.lower()
    except Exception:  # pragma: no cover - defensive, e.g. no device visible
        kind = ""
    if "v7" in kind:
        return 2, 4096, 32 * 1024 * 1024
    return 1, 8192, 64 * 1024 * 1024


def _narrow_mask(mask):
    # Ship bool / integer masks as int8 (4x less HBM traffic than f32). Float masks
    # pass through un-cast (casting in the wrapper would cost an HBM pass) and are
    # upcast inside the kernel.
    if jnp.issubdtype(mask.dtype, jnp.bool_) or jnp.issubdtype(mask.dtype, jnp.integer):
        return mask.astype(jnp.int8)
    return mask


# ---------------------------------------------------------------------------
# reduction='mean': per-core (8,128) partials of masked squared error and mask sum
# ---------------------------------------------------------------------------
def _masked_mse_partial_kernel(x_ref, t_ref, m_ref, sq_ref, ms_ref, *,
                               rows_valid, blocks_per_core, block_rows):
    c = pl.program_id(0)   # core / partial-output index
    i = pl.program_id(1)   # reduction step within this core ("arbitrary")

    @pl.when(i == 0)
    def _init():
        # (8,128) output blocks stay resident across the reduction axis (accumulator).
        sq_ref[...] = jnp.zeros_like(sq_ref)
        ms_ref[...] = jnp.zeros_like(ms_ref)

    vblk = c * blocks_per_core + i        # virtual (unclamped) block index
    row0 = vblk * block_rows
    groups = block_rows // 8              # static

    x = x_ref[...].astype(jnp.float32)
    t = t_ref[...].astype(jnp.float32)
    m = m_ref[...].astype(jnp.float32)

    def _accumulate(d, mv):
        # Reduce the (block_rows,128) step to an (8,128) partial: reshape splits whole
        # native (8,128) tiles into a leading dim (free), sum over it is vector adds.
        sq_ref[...] += jnp.sum((d * d).reshape(groups, 8, _LANES), axis=0)
        ms_ref[...] += jnp.sum(mv.reshape(groups, 8, _LANES), axis=0)

    is_full = row0 + block_rows <= rows_valid

    @pl.when(is_full)
    def _fast():
        # Interior blocks: no iota, no compare, no select -- minimum VPU work.
        _accumulate((x - t) * m, m)

    @pl.when(jnp.logical_not(is_full))
    def _edge():
        # Partial last block (DMA-padded rows may hold garbage, possibly NaN/Inf) or
        # clamped duplicate block (index_map clamped; everything must be zeroed).
        row_ids = row0 + jax.lax.broadcasted_iota(jnp.int32, (block_rows, _LANES), 0)
        valid = row_ids < rows_valid
        mv = jnp.where(valid, m, 0.0)
        d = jnp.where(valid, (x - t) * mv, 0.0)   # keep: 0 * NaN would poison the sum
        _accumulate(d, mv)


def _masked_mse_mean(inp, target, mask, *, block_rows_cap=None, force_ncores=None):
    n = int(inp.size)
    rows = n // _LANES

    if n == 0 or n % _LANES != 0 or rows % 8 != 0:
        # Ragged totals: a fused XLA reduction is already a single HBM pass over each
        # input; routing through the kernel would force a prefix-slice copy (an extra
        # full pass), so the fallback is the faster option here (review item #7).
        x = inp.astype(jnp.float32)
        t = target.astype(jnp.float32)
        m = mask.astype(jnp.float32)
        d = (x - t) * m
        return jnp.sum(d * d) / jnp.sum(m)

    ncores, max_block_rows, vmem_limit = _tpu_tuning()
    if block_rows_cap is not None:
        max_block_rows = block_rows_cap
    if force_ncores is not None:
        ncores = force_ncores

    m_in = _narrow_mask(mask)
    if m_in.dtype.itemsize < 4 and rows < 32:
        # Tiny inputs: avoid sub-(32,128) packed mask tiles; use the f32 mask path.
        m_in = mask.astype(jnp.float32)
    granule = 32 if m_in.dtype.itemsize < 4 else 8   # int8 native tile is (32,128)

    # Free lane-dense views (n is a multiple of 128 and rows of 8 -> no padding/copy slice).
    x2 = inp.reshape(rows, _LANES)
    t2 = target.reshape(rows, _LANES)
    m2 = m_in.reshape(rows, _LANES)

    block_rows = min(max_block_rows, _round_down(rows, granule))
    blocks_total = pl.cdiv(rows, block_rows)
    ncores_eff = ncores if blocks_total >= 2 else 1
    blocks_per_core = pl.cdiv(blocks_total, ncores_eff)

    if ncores_eff * blocks_per_core > blocks_total:
        # Only needed when the core split doesn't divide evenly: clamp the DMA to the
        # last real block; the kernel's masked path zeroes the duplicate's contribution.
        def in_map(c, i):
            return (jnp.minimum(c * blocks_per_core + i, blocks_total - 1), 0)
    else:
        def in_map(c, i):   # single-core / even split: plain index map, no clamp
            return (c * blocks_per_core + i, 0)

    tile_spec = pl.BlockSpec((block_rows, _LANES), in_map)
    part_spec = pl.BlockSpec((8, _LANES), lambda c, i: (c, 0))

    # Engage both v7x TensorCores on the leading axis; single-core chips never take
    # this path (ncores_eff == 1 there).
    core_sem = (getattr(pltpu, "CORE_PARALLEL", "parallel")
                if ncores_eff > 1 else "arbitrary")

    kernel = functools.partial(
        _masked_mse_partial_kernel, rows_valid=rows,
        blocks_per_core=blocks_per_core, block_rows=block_rows)

    sq_part, m_part = pl.pallas_call(
        kernel,
        out_shape=(jax.ShapeDtypeStruct((ncores_eff * 8, _LANES), jnp.float32),
                   jax.ShapeDtypeStruct((ncores_eff * 8, _LANES), jnp.float32)),
        grid_spec=pltpu.PrefetchScalarGridSpec(
            num_scalar_prefetch=0,
            grid=(ncores_eff, blocks_per_core),
            in_specs=[tile_spec, tile_spec, tile_spec],
            out_specs=(part_spec, part_spec)),
        compiler_params=pltpu.CompilerParams(
            dimension_semantics=(core_sem, "arbitrary"),
            vmem_limit_bytes=vmem_limit),
    )(x2, t2, m2)

    # Final tiny (<=16x128) reductions + divide are trivial XLA ops.
    # NOTE: an all-zero mask yields nan/inf, matching PyTorch's behavior.
    return jnp.sum(sq_part) / jnp.sum(m_part)


# ---------------------------------------------------------------------------
# reduction != 'mean': elementwise (input*mask - target*mask)**2
# ---------------------------------------------------------------------------
def _masked_sq_err_kernel(x_ref, t_ref, m_ref, o_ref):
    x = x_ref[...].astype(jnp.float32)
    t = t_ref[...].astype(jnp.float32)
    m = m_ref[...].astype(jnp.float32)
    d = (x - t) * m            # factored mask: one vmul/element saved vs x*m - t*m
    o_ref[...] = (d * d).astype(o_ref.dtype)


def _masked_sq_err_map(inp, target, mask):
    out_dtype = jnp.promote_types(inp.dtype, target.dtype)
    if jnp.issubdtype(mask.dtype, jnp.floating):
        out_dtype = jnp.promote_types(out_dtype, mask.dtype)

    n = int(inp.size)
    rows = n // _LANES
    if n == 0 or n % _LANES != 0 or rows % 8 != 0:
        # Ragged totals: fused XLA elementwise is already one pass; avoids both the
        # prefix-slice copy and the jnp.concatenate extra pass (review items #7/#8).
        xm = inp.astype(out_dtype) * mask.astype(out_dtype)
        tm = target.astype(out_dtype) * mask.astype(out_dtype)
        return ((xm - tm) * (xm - tm)).astype(out_dtype)

    _, max_block_rows, vmem_limit = _tpu_tuning()

    m_in = _narrow_mask(mask)
    if m_in.dtype.itemsize < 4 and rows < 32:
        m_in = mask.astype(jnp.float32)
    granule = 32 if m_in.dtype.itemsize < 4 else 8

    x2 = inp.reshape(rows, _LANES)
    t2 = target.reshape(rows, _LANES)
    m2 = m_in.reshape(rows, _LANES)

    block_rows = min(max_block_rows, _round_down(rows, granule))
    blocks_total = pl.cdiv(rows, block_rows)
    tile_spec = pl.BlockSpec((block_rows, _LANES), lambda i: (i, 0))

    out = pl.pallas_call(
        _masked_sq_err_kernel,
        out_shape=jax.ShapeDtypeStruct((rows, _LANES), out_dtype),
        grid_spec=pltpu.PrefetchScalarGridSpec(
            num_scalar_prefetch=0,
            grid=(blocks_total,),
            in_specs=[tile_spec, tile_spec, tile_spec],
            out_specs=tile_spec),
        compiler_params=pltpu.CompilerParams(
            dimension_semantics=("parallel",),
            vmem_limit_bytes=vmem_limit),
    )(x2, t2, m2)
    return out.reshape(inp.shape)


def masked_mse_loss(inp, target, mask, reduction="mean"):
    """JAX/Pallas equivalent of MaskedMSELoss(reduction=...).forward(input, target, mask)."""
    if reduction == "mean":
        return _masked_mse_mean(inp, target, mask)
    # Any non-'mean' reduction in the PyTorch module returns the elementwise map.
    return _masked_sq_err_map(inp, target, mask)


if __name__ == "__main__":
    key = jax.random.PRNGKey(0)
    k1, k2, k3 = jax.random.split(key, 3)

    def ref_mean(x, t, m):
        d = x * m - t * m
        return jnp.sum(d * d) / jnp.sum(m)

    # 1) Small NCHW batch (module convention), float mask, reduction='mean'
    #    (single full block -> fast path).
    B, C, H, W = 2, 4, 16, 16
    inp = jax.random.normal(k1, (B, C, H, W), dtype=jnp.float32)
    tgt = jax.random.normal(k2, (B, C, H, W), dtype=jnp.float32)
    mask = (jax.random.uniform(k3, (B, C, H, W)) > 0.5).astype(jnp.float32)
    loss = jax.block_until_ready(masked_mse_loss(inp, tgt, mask))
    assert jnp.allclose(loss, ref_mean(inp, tgt, mask), rtol=1e-4, atol=1e-6), loss

    # 2) Bool mask with >=32 rows -> int8 mask stream with 32-aligned blocks.
    i2 = jax.random.normal(k1, (2, 4, 32, 32), dtype=jnp.float32)
    t2 = jax.random.normal(k2, (2, 4, 32, 32), dtype=jnp.float32)
    m2 = jax.random.uniform(k3, (2, 4, 32, 32)) > 0.5
    loss2 = jax.block_until_ready(masked_mse_loss(i2, t2, m2))
    assert jnp.allclose(loss2, ref_mean(i2, t2, m2.astype(jnp.float32)),
                        rtol=1e-4, atol=1e-6), loss2

    # 3) reduction='none' elementwise map kernel.
    lmap = jax.block_until_ready(masked_mse_loss(inp, tgt, mask, reduction="none"))
    assert lmap.shape == inp.shape
    assert jnp.allclose(lmap, (inp * mask - tgt * mask) ** 2, rtol=1e-5, atol=1e-6)

    # 4) Multi-block reduction with a partial last block: exercises step accumulation
    #    and the masked edge path (single-core here so the demo runs on any generation).
    i4 = jax.random.normal(k1, (1, 1, 72, 128), dtype=jnp.float32)
    t4 = jax.random.normal(k2, (1, 1, 72, 128), dtype=jnp.float32)
    m4 = (jax.random.uniform(k3, (1, 1, 72, 128)) > 0.5).astype(jnp.float32)
    loss4 = jax.block_until_ready(
        _masked_mse_mean(i4, t4, m4, block_rows_cap=32, force_ncores=1))
    assert jnp.allclose(loss4, ref_mean(i4, t4, m4), rtol=1e-4, atol=1e-6), loss4

    # 5) Ragged element count: takes the single-pass fused fallback (no extra HBM pass).
    i5 = jax.random.normal(k1, (1, 3, 5, 7), dtype=jnp.float32)
    t5 = jax.random.normal(k2, (1, 3, 5, 7), dtype=jnp.float32)
    m5 = (jax.random.uniform(k3, (1, 3, 5, 7)) > 0.5).astype(jnp.float32)
    loss5 = jax.block_until_ready(masked_mse_loss(i5, t5, m5))
    assert jnp.allclose(loss5, ref_mean(i5, t5, m5), rtol=1e-4, atol=1e-6), loss5

    print("KERNEL_OK")
</pallas_src>

<mosaic_0001>
module attributes {stable_mosaic.version = 11 : i64} {
  func.func @_masked_mse_partial_kernel(%arg0: i32, %arg1: i32, %arg2: memref<16x128xf32, #tpu.memory_space<vmem>>, %arg3: memref<16x128xf32, #tpu.memory_space<vmem>>, %arg4: memref<16x128xf32, #tpu.memory_space<vmem>>, %arg5: memref<8x128xf32, #tpu.memory_space<vmem>>, %arg6: memref<8x128xf32, #tpu.memory_space<vmem>>) attributes {dimension_semantics = [#tpu.dimension_semantics<arbitrary>, #tpu.dimension_semantics<arbitrary>], iteration_bounds = array<i64: 1, 1>, scalar_prefetch = 0 : i64, scratch_operands = 0 : i64, tpu.core_type = #tpu.core_type<tc>, window_params = [{transform_indices = @transform_0, window_bounds = array<i64: 16, 128>}, {transform_indices = @transform_1, window_bounds = array<i64: 16, 128>}, {transform_indices = @transform_2, window_bounds = array<i64: 16, 128>}, {transform_indices = @transform_3, window_bounds = array<i64: 8, 128>}, {transform_indices = @transform_4, window_bounds = array<i64: 8, 128>}]} {
    %c0_i32 = arith.constant 0 : i32
    %0 = arith.cmpi eq, %arg1, %c0_i32 : i32
    %1 = arith.extui %0 : i1 to i32
    %c0_i32_0 = arith.constant 0 : i32
    %2 = arith.cmpi ne, %1, %c0_i32_0 : i32
    scf.if %2 {
      %cst = arith.constant 0.000000e+00 : f32
      %16 = vector.broadcast %cst : f32 to vector<8x128xf32>
      %c0_10 = arith.constant 0 : index
      %c0_11 = arith.constant 0 : index
      %17 = vector.load %arg5[%c0_10, %c0_11] : memref<8x128xf32, #tpu.memory_space<vmem>>, vector<8x128xf32>
      tpu.vector_store %arg5[%c0_10, %c0_11], %16 {strides = array<i32>} : memref<8x128xf32, #tpu.memory_space<vmem>>, vector<8x128xf32>,
      %cst_12 = arith.constant 0.000000e+00 : f32
      %18 = vector.broadcast %cst_12 : f32 to vector<8x128xf32>
      %c0_13 = arith.constant 0 : index
      %c0_14 = arith.constant 0 : index
      %19 = vector.load %arg6[%c0_13, %c0_14] : memref<8x128xf32, #tpu.memory_space<vmem>>, vector<8x128xf32>
      tpu.vector_store %arg6[%c0_13, %c0_14], %18 {strides = array<i32>} : memref<8x128xf32, #tpu.memory_space<vmem>>, vector<8x128xf32>,
    } else {
    }
    %c1_i32 = arith.constant 1 : i32
    %3 = arith.muli %arg0, %c1_i32 : i32
    %4 = arith.addi %3, %arg1 : i32
    %c16_i32 = arith.constant 16 : i32
    %5 = arith.muli %4, %c16_i32 : i32
    %c0 = arith.constant 0 : index
    %c0_1 = arith.constant 0 : index
    %6 = vector.load %arg2[%c0, %c0_1] : memref<16x128xf32, #tpu.memory_space<vmem>>, vector<16x128xf32>
    %c0_2 = arith.constant 0 : index
    %c0_3 = arith.constant 0 : index
    %7 = vector.load %arg3[%c0_2, %c0_3] : memref<16x128xf32, #tpu.memory_space<vmem>>, vector<16x128xf32>
    %c0_4 = arith.constant 0 : index
    %c0_5 = arith.constant 0 : index
    %8 = vector.load %arg4[%c0_4, %c0_5] : memref<16x128xf32, #tpu.memory_space<vmem>>, vector<16x128xf32>
    %c16_i32_6 = arith.constant 16 : i32
    %9 = arith.addi %5, %c16_i32_6 : i32
    %c16_i32_7 = arith.constant 16 : i32
    %10 = arith.cmpi sle, %9, %c16_i32_7 : i32
    %11 = arith.extui %10 : i1 to i32
    %c0_i32_8 = arith.constant 0 : i32
    %12 = arith.cmpi ne, %11, %c0_i32_8 : i32
    scf.if %12 {
      %16 = arith.subf %6, %7 : vector<16x128xf32>
      %17 = arith.mulf %16, %8 : vector<16x128xf32>
      %c0_10 = arith.constant 0 : index
      %c0_11 = arith.constant 0 : index
      %18 = vector.load %arg5[%c0_10, %c0_11] : memref<8x128xf32, #tpu.memory_space<vmem>>, vector<8x128xf32>
      %19 = arith.mulf %17, %17 : vector<16x128xf32>
      %20 = vector.shape_cast %19 : vector<16x128xf32> to vector<2x8x128xf32>
      %cst = arith.constant dense<0.000000e+00> : vector<8x128xf32>
      %21 = vector.multi_reduction <add>, %20, %cst [0] : vector<2x8x128xf32> to vector<8x128xf32>
      %22 = arith.addf %18, %21 : vector<8x128xf32>
      %c0_12 = arith.constant 0 : index
      %c0_13 = arith.constant 0 : index
      %23 = vector.load %arg5[%c0_12, %c0_13] : memref<8x128xf32, #tpu.memory_space<vmem>>, vector<8x128xf32>
      tpu.vector_store %arg5[%c0_12, %c0_13], %22 {strides = array<i32>} : memref<8x128xf32, #tpu.memory_space<vmem>>, vector<8x128xf32>,
      %c0_14 = arith.constant 0 : index
      %c0_15 = arith.constant 0 : index
      %24 = vector.load %arg6[%c0_14, %c0_15] : memref<8x128xf32, #tpu.memory_space<vmem>>, vector<8x128xf32>
      %25 = vector.shape_cast %8 : vector<16x128xf32> to vector<2x8x128xf32>
      %cst_16 = arith.constant dense<0.000000e+00> : vector<8x128xf32>
      %26 = vector.multi_reduction <add>, %25, %cst_16 [0] : vector<2x8x128xf32> to vector<8x128xf32>
      %27 = arith.addf %24, %26 : vector<8x128xf32>
      %c0_17 = arith.constant 0 : index
      %c0_18 = arith.constant 0 : index
      %28 = vector.load %arg6[%c0_17, %c0_18] : memref<8x128xf32, #tpu.memory_space<vmem>>, vector<8x128xf32>
      tpu.vector_store %arg6[%c0_17, %c0_18], %27 {strides = array<i32>} : memref<8x128xf32, #tpu.memory_space<vmem>>, vector<8x128xf32>,
    } else {
    }
    %true = arith.constant true
    %13 = arith.xori %10, %true : i1
    %14 = arith.extui %13 : i1 to i32
    %c0_i32_9 = arith.constant 0 : i32
    %15 = arith.cmpi ne, %14, %c0_i32_9 : i32
    scf.if %15 {
      %16 = tpu.iota {dimensions = array<i32: 0>} : vector<16x128xi32>
      %17 = vector.broadcast %5 : i32 to vector<16x128xi32>
      %18 = arith.addi %17, %16 : vector<16x128xi32>
      %c16_i32_10 = arith.constant 16 : i32
      %19 = vector.broadcast %c16_i32_10 : i32 to vector<16x128xi32>
      %20 = arith.cmpi slt, %18, %19 : vector<16x128xi32>
      %cst = arith.constant 0.000000e+00 : f32
      %21 = vector.broadcast %cst : f32 to vector<16x128xf32>
      %22 = arith.select %20, %8, %21 : vector<16x128xi1>, vector<16x128xf32>
      %23 = arith.subf %6, %7 : vector<16x128xf32>
      %24 = arith.mulf %23, %22 : vector<16x128xf32>
      %cst_11 = arith.constant 0.000000e+00 : f32
      %25 = vector.broadcast %cst_11 : f32 to vector<16x128xf32>
      %26 = arith.select %20, %24, %25 : vector<16x128xi1>, vector<16x128xf32>
      %c0_12 = arith.constant 0 : index
      %c0_13 = arith.constant 0 : index
      %27 = vector.load %arg5[%c0_12, %c0_13] : memref<8x128xf32, #tpu.memory_space<vmem>>, vector<8x128xf32>
      %28 = arith.mulf %26, %26 : vector<16x128xf32>
      %29 = vector.shape_cast %28 : vector<16x128xf32> to vector<2x8x128xf32>
      %cst_14 = arith.constant dense<0.000000e+00> : vector<8x128xf32>
      %30 = vector.multi_reduction <add>, %29, %cst_14 [0] : vector<2x8x128xf32> to vector<8x128xf32>
      %31 = arith.addf %27, %30 : vector<8x128xf32>
      %c0_15 = arith.constant 0 : index
      %c0_16 = arith.constant 0 : index
      %32 = vector.load %arg5[%c0_15, %c0_16] : memref<8x128xf32, #tpu.memory_space<vmem>>, vector<8x128xf32>
      tpu.vector_store %arg5[%c0_15, %c0_16], %31 {strides = array<i32>} : memref<8x128xf32, #tpu.memory_space<vmem>>, vector<8x128xf32>,
      %c0_17 = arith.constant 0 : index
      %c0_18 = arith.constant 0 : index
      %33 = vector.load %arg6[%c0_17, %c0_18] : memref<8x128xf32, #tpu.memory_space<vmem>>, vector<8x128xf32>
      %34 = vector.shape_cast %22 : vector<16x128xf32> to vector<2x8x128xf32>
      %cst_19 = arith.constant dense<0.000000e+00> : vector<8x128xf32>
      %35 = vector.multi_reduction <add>, %34, %cst_19 [0] : vector<2x8x128xf32> to vector<8x128xf32>
      %36 = arith.addf %33, %35 : vector<8x128xf32>
      %c0_20 = arith.constant 0 : index
      %c0_21 = arith.constant 0 : index
      %37 = vector.load %arg6[%c0_20, %c0_21] : memref<8x128xf32, #tpu.memory_space<vmem>>, vector<8x128xf32>
      tpu.vector_store %arg6[%c0_20, %c0_21], %36 {strides = array<i32>} : memref<8x128xf32, #tpu.memory_space<vmem>>, vector<8x128xf32>,
    } else {
    }
    return
  }
  func.func @transform_0(%arg0: i32, %arg1: i32) -> (i32, i32) {
    %c1_i32 = arith.constant 1 : i32
    %0 = arith.muli %arg0, %c1_i32 : i32
    %1 = arith.addi %0, %arg1 : i32
    %c0_i32 = arith.constant 0 : i32
    %c0_i32_0 = arith.constant 0 : i32
    return %1, %c0_i32 : i32, i32
  }
  func.func @transform_1(%arg0: i32, %arg1: i32) -> (i32, i32) {
    %c1_i32 = arith.constant 1 : i32
    %0 = arith.muli %arg0, %c1_i32 : i32
    %1 = arith.addi %0, %arg1 : i32
    %c0_i32 = arith.constant 0 : i32
    %c0_i32_0 = arith.constant 0 : i32
    return %1, %c0_i32 : i32, i32
  }
  func.func @transform_2(%arg0: i32, %arg1: i32) -> (i32, i32) {
    %c1_i32 = arith.constant 1 : i32
    %0 = arith.muli %arg0, %c1_i32 : i32
    %1 = arith.addi %0, %arg1 : i32
    %c0_i32 = arith.constant 0 : i32
    %c0_i32_0 = arith.constant 0 : i32
    return %1, %c0_i32 : i32, i32
  }
  func.func @transform_3(%arg0: i32, %arg1: i32) -> (i32, i32) {
    %c0_i32 = arith.constant 0 : i32
    %c0_i32_0 = arith.constant 0 : i32
    return %arg0, %c0_i32 : i32, i32
  }
  func.func @transform_4(%arg0: i32, %arg1: i32) -> (i32, i32) {
    %c0_i32 = arith.constant 0 : i32
    %c0_i32_0 = arith.constant 0 : i32
    return %arg0, %c0_i32 : i32, i32
  }
}

</mosaic_0001>

<llo_original>
// kernel: tpu_custom_call.1
$region0: #{tpu_custom_call.1}
  #allocation0 [shape = 'u32[]', space=smem, size = 0x4, offset = 0x4, fixed_abs, tag = 'smem constant byte address 0x4 - core index']
  #allocation1 [shape = 'u32[144,128]{1,0:T(1,128)}', space=vmem, size = 0x12000, scoped, tag = 'internal scratch']
  %s0 = inlined_call_operand.hbm [shape: f32[16,128], index: 0, kind: input, shape index: {}]
  %s1 = inlined_call_operand.hbm [shape: f32[16,128], index: 1, kind: input, shape index: {}]
  %s2 = inlined_call_operand.hbm [shape: f32[16,128], index: 2, kind: input, shape index: {}]
  %s3 = inlined_call_operand.hbm [shape: f32[8,128], index: 3, kind: output, shape index: {0}]
  %s4 = inlined_call_operand.hbm [shape: f32[8,128], index: 4, kind: output, shape index: {1}]
  %5 = xla_tuple %s3, %s4
  %s6 = sld [smem:[#allocation0]]
  $region54: #{tpu_custom_call.1} parent=0
    _
  %s8 = ssub.s32 1, %s6
  %s9 = scalar_select 0, %s8, %s6
  $region1: #{tpu_custom_call.1} parent=0
    #allocation2 [shape = 'u8[8192]{0}', space=vmem, size = 0x2000, scoped, tag = 'input window, operand 0, single buffered']
    #allocation3 [shape = 's32[1]{0}', space=sflag, size = 0x4, scoped, tag = 'scoped memory for tpu_custom_call.1']
    #allocation4 [shape = 's32[1]{0}', space=sflag, size = 0x4, scoped, tag = 'scoped memory for tpu_custom_call.1']
    #allocation5 [shape = 'u8[8192]{0}', space=vmem, size = 0x2000, scoped, tag = 'input window, operand 1, single buffered']
    #allocation6 [shape = 's32[1]{0}', space=sflag, size = 0x4, scoped, tag = 'scoped memory for tpu_custom_call.1']
    #allocation7 [shape = 'u8[8192]{0}', space=vmem, size = 0x2000, scoped, tag = 'input window, operand 2, single buffered']
    #allocation8 [shape = 'u8[4096]{0}', space=vmem, size = 0x1000, scoped, tag = 'output window, operand 0, single buffered']
    #allocation9 [shape = 'u8[4096]{0}', space=vmem, size = 0x1000, scoped, tag = 'output window, operand 1, single buffered']
    #allocation10 [shape = 's32[1]{0}', space=sflag, size = 0x4, scoped, tag = 'scoped memory for tpu_custom_call.1']
    %10 = vsyncpa [#allocation3], 0
    %11 = vsyncpa [#allocation6], 0
    %12 = vsyncpa [#allocation4], 0
    %13 = vsyncpa [#allocation10], 0
    // Predicated region
    $region2: #{tpu_custom_call.1} parent=1 // pred_check
      _
    $region3: #{tpu_custom_call.1} parent=1 // pred_check_branch
      %15 = sbr.rel (0) target = $region5
    $region4: #{tpu_custom_call.1} parent=1 // pred_region
      %s16 = sadd.s32 0, 0
      %s17 = smul.u32 2, %s16
      %s19 = ssub.s32 256, 256
      %20 = vsyncadd [#allocation3], %s19
      %s21 = smul.addr %s17, 128
      %s22 = scalar_lea.hbm %s0, %s21
      %s23 = sshll.u32 [#allocation2], 4
      %s24 = int_to_ptr.vmem [resolvable:$true] %s23
      %29 = dma.hbm_to_vmem [thread:$0]  %s22, 256, %s24, [#allocation3], 128, 128, 8
    $region5: #{tpu_custom_call.1} parent=1 // pred_fallthru
      _
    // Predicated region
    $region6: #{tpu_custom_call.1} parent=1 // pred_check
      _
    $region7: #{tpu_custom_call.1} parent=1 // pred_check_branch
      %31 = sbr.rel (0) target = $region9
    $region8: #{tpu_custom_call.1} parent=1 // pred_region
      %s32 = sadd.s32 0, 0
      %s33 = smul.u32 2, %s32
      %s35 = ssub.s32 256, 256
      %36 = vsyncadd [#allocation6], %s35
      %s37 = smul.addr %s33, 128
      %s38 = scalar_lea.hbm %s1, %s37
      %s39 = sshll.u32 [#allocation5], 4
      %s40 = int_to_ptr.vmem [resolvable:$true] %s39
      %45 = dma.hbm_to_vmem [thread:$0]  %s38, 256, %s40, [#allocation6], 128, 128, 8
    $region9: #{tpu_custom_call.1} parent=1 // pred_fallthru
      _
    // Predicated region
    $region10: #{tpu_custom_call.1} parent=1 // pred_check
      _
    $region11: #{tpu_custom_call.1} parent=1 // pred_check_branch
      %47 = sbr.rel (0) target = $region13
    $region12: #{tpu_custom_call.1} parent=1 // pred_region
      %s48 = sadd.s32 0, 0
      %s49 = smul.u32 2, %s48
      %s51 = ssub.s32 256, 256
      %52 = vsyncadd [#allocation6], %s51
      %s53 = smul.addr %s49, 128
      %s54 = scalar_lea.hbm %s2, %s53
      %s55 = sshll.u32 [#allocation7], 4
      %s56 = int_to_ptr.vmem [resolvable:$true] %s55
      %61 = dma.hbm_to_vmem [thread:$0]  %s54, 256, %s56, [#allocation6], 128, 128, 8
    $region13: #{tpu_custom_call.1} parent=1 // pred_fallthru
      _
    // Predicated region
    $region14: #{tpu_custom_call.1} parent=1 // pred_check
      _
    $region15: #{tpu_custom_call.1} parent=1 // pred_check_branch
      %63 = sbr.rel (0) target = $region17
    $region16: #{tpu_custom_call.1} parent=1 // pred_region
      %64 = dma.done [#allocation3], 256
    $region17: #{tpu_custom_call.1} parent=1 // pred_fallthru
      _
    // Predicated region
    $region18: #{tpu_custom_call.1} parent=1 // pred_check
      _
    $region19: #{tpu_custom_call.1} parent=1 // pred_check_branch
      %66 = sbr.rel (0) target = $region21
    $region20: #{tpu_custom_call.1} parent=1 // pred_region
      %67 = dma.done [#allocation6], 256
    $region21: #{tpu_custom_call.1} parent=1 // pred_fallthru
      _
    // Predicated region
    $region22: #{tpu_custom_call.1} parent=1 // pred_check
      _
    $region23: #{tpu_custom_call.1} parent=1 // pred_check_branch
      %69 = sbr.rel (0) target = $region25
    $region24: #{tpu_custom_call.1} parent=1 // pred_region
      %70 = dma.done [#allocation6], 256
    $region25: #{tpu_custom_call.1} parent=1 // pred_fallthru
      _
    %s71 = sadd.s32 0, 0
    %s72 = smul.u32 2, %s71
    %s73 = sadd.s32 0, 0
    %s74 = smul.u32 2, %s73
    %s75 = sadd.s32 0, 0
    %s76 = smul.u32 2, %s75
    %p77 = scmp.eq.s32.totalorder 0, 0
    // Predicated region
    $region26: #{tpu_custom_call.1} parent=1 // pred_check
      %p78 = pneg %p77
    $region27: #{tpu_custom_call.1} parent=1 // pred_check_branch
      %80 = sbr.rel (%p78) target = $region29
    $region28: #{tpu_custom_call.1} parent=1 // pred_region
      %81 = vst [vmem:[#allocation8] sm:$0xff] 0.0
      %82 = vst [vmem:[#allocation9] sm:$0xff] 0.0
    $region29: #{tpu_custom_call.1} parent=1 // pred_fallthru
      _
    %s83 = sadd.s32 0, 0
    %s84 = smul.u32 %s83, 16
    %v85 = vld [vmem:[#allocation2] sm:$0xff]
    %v86 = vld [vmem:[#allocation2 + $0x8] sm:$0xff]
    %v87 = vld [vmem:[#allocation5] sm:$0xff]
    %v88 = vld [vmem:[#allocation5 + $0x8] sm:$0xff]
    %v89 = vld [vmem:[#allocation7] sm:$0xff]
    %v90 = vld [vmem:[#allocation7 + $0x8] sm:$0xff]
    %s91 = sadd.s32 %s84, 16
    %p92 = scmp.le.s32.totalorder %s91, 16
    // Predicated region
    $region30: #{tpu_custom_call.1} parent=1 // pred_check
      %p93 = pneg %p92
    $region31: #{tpu_custom_call.1} parent=1 // pred_check_branch
      %95 = sbr.rel (%p93) target = $region33
    $region32: #{tpu_custom_call.1} parent=1 // pred_region
      %v96 = vsub.f32 %v85, %v87
      %v97 = vsub.f32 %v86, %v88
      %v98 = vmul.f32 %v96, %v89
      %v99 = vmul.f32 %v97, %v90
      %v100 = vld [vmem:[#allocation8] sm:$0xff]
      %v101 = vmul.f32 %v98, %v98
      %v102 = vmul.f32 %v99, %v99
      %v103 = vadd.f32 %v101, %v102
      %v104 = vadd.f32 %v100, %v103
      %105 = vst [vmem:[#allocation8] sm:$0xff] %v104
      %v106 = vld [vmem:[#allocation9] sm:$0xff]
      %v107 = vadd.f32 %v89, %v90
      %v108 = vadd.f32 %v106, %v107
      %109 = vst [vmem:[#allocation9] sm:$0xff] %v108
    $region33: #{tpu_custom_call.1} parent=1 // pred_fallthru
      _
    %p110 = scmp.gt.s32.totalorder %s91, 16
    // Predicated region
    $region34: #{tpu_custom_call.1} parent=1 // pred_check
      %p111 = pneg %p110
    $region35: #{tpu_custom_call.1} parent=1 // pred_check_branch
      %113 = sbr.rel (%p111) target = $region37
    $region36: #{tpu_custom_call.1} parent=1 // pred_region
      %v114 = vlaneseq
      %v115 = vshrl.u32 %v114, 7
      %v116 = vadd.s32 %v115, 8
      %v117 = vstv %s84
      %v118 = vadd.s32 %v117, %v115
      %v119 = vadd.s32 %v117, %v116
      %vm120 = vcmp.lt.s32.totalorder %v118, 16
      %vm121 = vcmp.lt.s32.totalorder %v119, 16
      %v122 = vsel %vm120, %v89, 0.0
      %v123 = vsel %vm121, %v90, 0.0
      %v124 = vsub.f32 %v85, %v87
      %v125 = vsub.f32 %v86, %v88
      %v126 = vmul.f32 %v124, %v122
      %v127 = vmul.f32 %v125, %v123
      %v128 = vsel %vm120, %v126, 0.0
      %v129 = vsel %vm121, %v127, 0.0
      %v130 = vld [vmem:[#allocation8] sm:$0xff]
      %v131 = vmul.f32 %v128, %v128
      %v132 = vmul.f32 %v129, %v129
      %v133 = vadd.f32 %v131, %v132
      %v134 = vadd.f32 %v130, %v133
      %135 = vst [vmem:[#allocation8] sm:$0xff] %v134
      %v136 = vld [vmem:[#allocation9] sm:$0xff]
      %v137 = vadd.f32 %v122, %v123
      %v138 = vadd.f32 %v136, %v137
      %139 = vst [vmem:[#allocation9] sm:$0xff] %v138
    $region37: #{tpu_custom_call.1} parent=1 // pred_fallthru
      _
    // Predicated region
    $region38: #{tpu_custom_call.1} parent=1 // pred_check
      _
    $region39: #{tpu_custom_call.1} parent=1 // pred_check_branch
      %141 = sbr.rel (0) target = $region41
    $region40: #{tpu_custom_call.1} parent=1 // pred_region
      %s143 = ssub.s32 128, 128
      %144 = vsyncadd [#allocation4], %s143
      %s146 = sshll.u32 [#allocation8], 4
      %s147 = int_to_ptr.vmem [resolvable:$true] %s146
      %149 = dma.vmem_to_hbm [thread:$0]  %s147, 128, %s3, [#allocation4]
    $region41: #{tpu_custom_call.1} parent=1 // pred_fallthru
      _
    // Predicated region
    $region42: #{tpu_custom_call.1} parent=1 // pred_check
      _
    $region43: #{tpu_custom_call.1} parent=1 // pred_check_branch
      %151 = sbr.rel (0) target = $region45
    $region44: #{tpu_custom_call.1} parent=1 // pred_region
      %s153 = ssub.s32 128, 128
      %154 = vsyncadd [#allocation10], %s153
      %s156 = sshll.u32 [#allocation9], 4
      %s157 = int_to_ptr.vmem [resolvable:$true] %s156
      %159 = dma.vmem_to_hbm [thread:$0]  %s157, 128, %s4, [#allocation10]
    $region45: #{tpu_custom_call.1} parent=1 // pred_fallthru
      _
    // Predicated region
    $region46: #{tpu_custom_call.1} parent=1 // pred_check
      _
    $region47: #{tpu_custom_call.1} parent=1 // pred_check_branch
      %161 = sbr.rel (0) target = $region49
    $region48: #{tpu_custom_call.1} parent=1 // pred_region
      %162 = dma.done [#allocation4], 128
    $region49: #{tpu_custom_call.1} parent=1 // pred_fallthru
      _
    // Predicated region
    $region50: #{tpu_custom_call.1} parent=1 // pred_check
      _
    $region51: #{tpu_custom_call.1} parent=1 // pred_check_branch
      %164 = sbr.rel (0) target = $region53
    $region52: #{tpu_custom_call.1} parent=1 // pred_region
      %165 = dma.done [#allocation10], 128
    $region53: #{tpu_custom_call.1} parent=1 // pred_fallthru
      _
    %166 = vsyncpa [#allocation3], 1
    %167 = vsyncpa [#allocation6], 1
    %168 = vsyncpa [#allocation4], 1
    %169 = vsyncpa [#allocation10], 1

</llo_original>
